<compile_context>
chip_gen: v7x
topology: tpu7x:2x2x1
jax: 0.10.0
libtpu: 0.0.40
codegen_flags: <defaults>
</compile_context>

<pallas_src>
import functools

import jax
import jax.numpy as jnp
from jax import lax
from jax.experimental import pallas as pl
from jax.experimental.pallas import tpu as pltpu


def _round_up(n, m):
    return ((n + m - 1) // m) * m


def _highway_resident_kernel(x_ref, w_ref, b_ref, o_ref, acc_ref, *,
                             num_layers, mxu_dtype):
    """All L layers in one grid step; weight/bias stacks resident in VMEM.

    Grid = (row_tiles,).  acc_ref (f32 VMEM) carries the activation across the
    unrolled layer loop.  Each layer:
        h = acc @ [W_t | W_g] + [b_t | b_g]
        t = relu(h[:, :D]);  g = sigmoid(h[:, D:])  (tanh form)
        acc = acc + g * (t - acc)
    """
    d = acc_ref.shape[-1]
    acc_ref[...] = x_ref[...].astype(jnp.float32)

    def layer_body(l, carry):
        x = acc_ref[...]                                    # (tile, D) f32, resident
        w = w_ref[l].astype(mxu_dtype)                      # (D, 2D)
        b = b_ref[l].astype(jnp.float32)                    # (1, 2D)
        # One fused MXU matmul filling 256 output lanes; f32 accumulation.
        h = jnp.dot(x.astype(mxu_dtype), w,
                    preferred_element_type=jnp.float32) + b
        t = jnp.maximum(h[:, :d], 0.0)                      # transform (VPU)
        g = 0.5 * (jnp.tanh(0.5 * h[:, d:]) + 1.0)          # sigmoid, 1 EUP op
        acc_ref[...] = x + g * (t - x)                      # == g*t + (1-g)*x
        return carry

    lax.fori_loop(0, num_layers, layer_body, 0, unroll=True)
    o_ref[...] = acc_ref[...].astype(o_ref.dtype)


def _highway_streamed_kernel(x_ref, w_ref, b_ref, o_ref, acc_ref, *, mxu_dtype):
    """Fallback for huge weight stacks: grid = (row_tiles, L), layer innermost."""
    layer = pl.program_id(1)
    d = acc_ref.shape[-1]

    @pl.when(layer == 0)
    def _():
        acc_ref[...] = x_ref[...].astype(jnp.float32)

    x = acc_ref[...]
    h = jnp.dot(x.astype(mxu_dtype), w_ref[...].astype(mxu_dtype),
                preferred_element_type=jnp.float32) + b_ref[...].astype(jnp.float32)
    t = jnp.maximum(h[:, :d], 0.0)
    g = 0.5 * (jnp.tanh(0.5 * h[:, d:]) + 1.0)
    acc_ref[...] = x + g * (t - x)

    @pl.when(layer == pl.num_programs(1) - 1)
    def _():
        o_ref[...] = acc_ref[...].astype(o_ref.dtype)


def highway_forward(x, w_stack, b_stack, *, tm=1024, mxu_dtype=jnp.bfloat16,
                    resident_weight_budget=24 << 20):
    """Highway forward (eval mode).

    x:        (..., D) array.
    w_stack:  (L, D, 2D) — per layer concat([W_t, W_g], axis=1), stored (in, out)
              so the kernel computes x @ W + b (== PyTorch x @ W_pt.T + b).
    b_stack:  (L, 1, 2D) — concat([b_t, b_g]).
    mxu_dtype: operand dtype for the MXU matmul (bf16 default; f32 for exactness).
    """
    orig_shape = x.shape
    d = orig_shape[-1]
    num_layers = int(w_stack.shape[0])

    x2 = x.reshape(-1, d)
    n = x2.shape[0]

    # bf16 packs 16 rows per sublane tile, f32 packs 8.
    row_align = 16 if x.dtype == jnp.bfloat16 else 8
    n_al = _round_up(n, row_align)
    tile = min(tm, n_al)
    # Guarantee >= 2 row tiles for medium inputs so the "parallel" row axis can
    # be split across 2 TensorCores (v7x) / megacore.
    if tile == n_al and n_al >= 2 * 256:
        tile = _round_up((n_al + 1) // 2, row_align)
    n_pad = _round_up(n, tile)
    if n_pad != n:
        x2 = jnp.pad(x2, ((0, n_pad - n), (0, 0)))
    row_tiles = n_pad // tile

    # Sizing / cost bookkeeping.
    w_bytes = num_layers * d * 2 * d * w_stack.dtype.itemsize
    b_bytes = num_layers * 2 * d * b_stack.dtype.itemsize
    io_bytes = (2 * tile * d * x2.dtype.itemsize      # x double buffer
                + 2 * tile * d * x.dtype.itemsize     # out double buffer
                + tile * d * 4                        # f32 acc scratch
                + tile * 2 * d * 4)                   # per-layer h intermediate
    cost = pl.CostEstimate(
        flops=2 * n_pad * num_layers * d * (2 * d),
        transcendentals=n_pad * num_layers * d,
        bytes_accessed=(x2.size * x2.dtype.itemsize
                        + n_pad * d * x.dtype.itemsize
                        + w_stack.size * w_stack.dtype.itemsize
                        + b_stack.size * b_stack.dtype.itemsize),
    )

    if (w_bytes + b_bytes) <= resident_weight_budget:
        # Primary path: resident weight stack, layers looped inside the kernel.
        vmem_limit = int(min(64 << 20,
                             max(2 * (w_bytes + b_bytes + io_bytes), 32 << 20)))
        kernel = functools.partial(_highway_resident_kernel,
                                   num_layers=num_layers, mxu_dtype=mxu_dtype)
        out = pl.pallas_call(
            kernel,
            out_shape=jax.ShapeDtypeStruct((n_pad, d), x.dtype),
            grid_spec=pltpu.PrefetchScalarGridSpec(
                num_scalar_prefetch=0,
                grid=(row_tiles,),
                in_specs=[
                    pl.BlockSpec((tile, d), lambda i: (i, 0)),
                    # Full weight / bias stacks; same block every step -> one DMA.
                    pl.BlockSpec((num_layers, d, 2 * d), lambda i: (0, 0, 0)),
                    pl.BlockSpec((num_layers, 1, 2 * d), lambda i: (0, 0, 0)),
                ],
                out_specs=pl.BlockSpec((tile, d), lambda i: (i, 0)),
                scratch_shapes=[pltpu.VMEM((tile, d), jnp.float32)],
            ),
            compiler_params=pltpu.CompilerParams(
                dimension_semantics=("parallel",),
                vmem_limit_bytes=vmem_limit,
            ),
            cost_estimate=cost,
        )(x2, w_stack, b_stack)
    else:
        # Fallback for very large D / L: stream one layer's weights per grid step.
        kernel = functools.partial(_highway_streamed_kernel, mxu_dtype=mxu_dtype)
        out = pl.pallas_call(
            kernel,
            out_shape=jax.ShapeDtypeStruct((n_pad, d), x.dtype),
            grid_spec=pltpu.PrefetchScalarGridSpec(
                num_scalar_prefetch=0,
                grid=(row_tiles, num_layers),
                in_specs=[
                    pl.BlockSpec((tile, d), lambda i, l: (i, 0)),
                    pl.BlockSpec((None, d, 2 * d), lambda i, l: (l, 0, 0)),
                    pl.BlockSpec((None, 1, 2 * d), lambda i, l: (l, 0, 0)),
                ],
                out_specs=pl.BlockSpec((tile, d), lambda i, l: (i, 0)),
                scratch_shapes=[pltpu.VMEM((tile, d), jnp.float32)],
            ),
            compiler_params=pltpu.CompilerParams(
                dimension_semantics=("parallel", "arbitrary"),
            ),
            cost_estimate=cost,
        )(x2, w_stack, b_stack)

    return out[:n].reshape(orig_shape)


def init_highway_params(key, size, num_layers, dtype=jnp.float32):
    """Deterministic synthetic parameters, pre-packed for the fused kernel.

    Returns (w_stack, b_stack) with shapes (L, D, 2D) and (L, 1, 2D), where the
    first D output columns of each layer are the transform linear and the last
    D are the gate linear (weights stored as (in, out) = PyTorch W.T).
    """
    scale = 1.0 / jnp.sqrt(jnp.asarray(size, dtype=jnp.float32))
    w_layers, b_layers = [], []
    for _ in range(num_layers):
        key, k1, k2, k3, k4 = jax.random.split(key, 5)
        w_t = (jax.random.normal(k1, (size, size), dtype=jnp.float32) * scale).astype(dtype)
        b_t = (jax.random.normal(k2, (1, size), dtype=jnp.float32) * scale).astype(dtype)
        w_g = (jax.random.normal(k3, (size, size), dtype=jnp.float32) * scale).astype(dtype)
        b_g = (jax.random.normal(k4, (1, size), dtype=jnp.float32) * scale).astype(dtype)
        w_layers.append(jnp.concatenate([w_t, w_g], axis=1))   # (D, 2D)
        b_layers.append(jnp.concatenate([b_t, b_g], axis=1))   # (1, 2D)
    return jnp.stack(w_layers, axis=0), jnp.stack(b_layers, axis=0)


def highway_reference(x, w_stack, b_stack):
    """Pure-JAX f32 reference (same semantics as the PyTorch module in eval mode)."""
    orig_shape = x.shape
    d = orig_shape[-1]
    out = x.reshape(-1, d).astype(jnp.float32)
    num_layers = w_stack.shape[0]
    for l in range(num_layers):
        w = w_stack[l].astype(jnp.float32)
        b = b_stack[l].astype(jnp.float32)
        h = out @ w + b
        t = jax.nn.relu(h[:, :d])
        g = jax.nn.sigmoid(h[:, d:])
        out = g * t + (1.0 - g) * out
    return out.reshape(orig_shape).astype(x.dtype)


if __name__ == "__main__":
    size = 128          # highway hidden size (lane-aligned)
    num_layers = 2
    batch, seq = 2, 8   # 16 tokens total (tiny -> single row tile)

    key = jax.random.PRNGKey(0)
    key, kx = jax.random.split(key)
    x = jax.random.normal(kx, (batch, seq, size), dtype=jnp.float32)
    w_stack, b_stack = init_highway_params(key, size, num_layers)

    ref = highway_reference(x, w_stack, b_stack)

    # Exact path (f32 MXU operands): tight match to the f32 reference.
    out_f32 = jax.block_until_ready(
        highway_forward(x, w_stack, b_stack, mxu_dtype=jnp.float32))
    assert out_f32.shape == x.shape and out_f32.dtype == x.dtype
    assert jnp.allclose(out_f32, ref, atol=1e-4, rtol=1e-4), "f32 path mismatch"

    # Default fast path (bf16 MXU operands, f32 carry): looser tolerance.
    out = jax.block_until_ready(highway_forward(x, w_stack, b_stack))
    assert out.shape == x.shape and out.dtype == x.dtype
    assert jnp.allclose(out, ref, atol=6e-2, rtol=6e-2), "bf16 path mismatch"

    print("KERNEL_OK")
</pallas_src>

<mosaic_0001>
module attributes {stable_mosaic.version = 11 : i64} {
  func.func @_highway_resident_kernel(%arg0: i32, %arg1: memref<16x128xf32, #tpu.memory_space<vmem>>, %arg2: memref<2x128x256xf32, #tpu.memory_space<vmem>>, %arg3: memref<2x1x256xf32, #tpu.memory_space<vmem>>, %arg4: memref<16x128xf32, #tpu.memory_space<vmem>>, %arg5: memref<16x128xf32, #tpu.memory_space<vmem>>) attributes {dimension_semantics = [#tpu.dimension_semantics<parallel>], iteration_bounds = array<i64: 1>, scalar_prefetch = 0 : i64, scratch_operands = 1 : i64, tpu.core_type = #tpu.core_type<tc>, window_params = [{transform_indices = @transform_0, window_bounds = array<i64: 16, 128>}, {pipeline_mode = #tpu.pipeline_mode<synchronous>, transform_indices = @transform_1, window_bounds = array<i64: 2, 128, 256>}, {pipeline_mode = #tpu.pipeline_mode<synchronous>, transform_indices = @transform_2, window_bounds = array<i64: 2, 1, 256>}, {transform_indices = @transform_3, window_bounds = array<i64: 16, 128>}]} {
    %c0 = arith.constant 0 : index
    %c0_0 = arith.constant 0 : index
    %0 = vector.load %arg1[%c0, %c0_0] : memref<16x128xf32, #tpu.memory_space<vmem>>, vector<16x128xf32>
    %c0_1 = arith.constant 0 : index
    %c0_2 = arith.constant 0 : index
    %1 = vector.load %arg5[%c0_1, %c0_2] : memref<16x128xf32, #tpu.memory_space<vmem>>, vector<16x128xf32>
    tpu.vector_store %arg5[%c0_1, %c0_2], %0 {strides = array<i32>} : memref<16x128xf32, #tpu.memory_space<vmem>>, vector<16x128xf32>,
    %c0_i32 = arith.constant 0 : i32
    %c0_3 = arith.constant 0 : index
    %c0_4 = arith.constant 0 : index
    %2 = vector.load %arg5[%c0_3, %c0_4] : memref<16x128xf32, #tpu.memory_space<vmem>>, vector<16x128xf32>
    %3 = arith.index_cast %c0_i32 : i32 to index
    %c0_5 = arith.constant 0 : index
    %c0_6 = arith.constant 0 : index
    %4 = vector.load %arg2[%3, %c0_5, %c0_6] : memref<2x128x256xf32, #tpu.memory_space<vmem>>, vector<1x128x256xf32>
    %5 = vector.shape_cast %4 : vector<1x128x256xf32> to vector<128x256xf32>
    %6 = arith.index_cast %c0_i32 : i32 to index
    %c0_7 = arith.constant 0 : index
    %c0_8 = arith.constant 0 : index
    %7 = vector.load %arg3[%6, %c0_7, %c0_8] : memref<2x1x256xf32, #tpu.memory_space<vmem>>, vector<1x1x256xf32>
    %8 = vector.shape_cast %7 : vector<1x1x256xf32> to vector<1x256xf32>
    %cst = arith.constant dense<0.000000e+00> : vector<16x256xf32>
    %9 = tpu.matmul %2, %5, %cst {dimension_numbers = #tpu.dot_dimension_numbers<[1], [0], [0], [1], [0, 0, 1, 1], [], []>} : vector<16x128xf32>, vector<128x256xf32>, vector<16x256xf32> -> vector<16x256xf32>
    %10 = vector.broadcast %8 : vector<1x256xf32> to vector<16x256xf32>
    %11 = arith.addf %9, %10 : vector<16x256xf32>
    %12 = vector.extract_strided_slice %11 {offsets = [0, 0], sizes = [16, 128], strides = [1, 1]} : vector<16x256xf32> to vector<16x128xf32>
    %cst_9 = arith.constant 0.000000e+00 : f32
    %13 = vector.broadcast %cst_9 : f32 to vector<16x128xf32>
    %14 = arith.maximumf %12, %13 : vector<16x128xf32>
    %15 = vector.extract_strided_slice %11 {offsets = [0, 128], sizes = [16, 128], strides = [1, 1]} : vector<16x256xf32> to vector<16x128xf32>
    %cst_10 = arith.constant 5.000000e-01 : f32
    %16 = vector.broadcast %cst_10 : f32 to vector<16x128xf32>
    %17 = arith.mulf %16, %15 : vector<16x128xf32>
    %18 = math.tanh %17 : vector<16x128xf32>
    %cst_11 = arith.constant 1.000000e+00 : f32
    %19 = vector.broadcast %cst_11 : f32 to vector<16x128xf32>
    %20 = arith.addf %18, %19 : vector<16x128xf32>
    %cst_12 = arith.constant 5.000000e-01 : f32
    %21 = vector.broadcast %cst_12 : f32 to vector<16x128xf32>
    %22 = arith.mulf %21, %20 : vector<16x128xf32>
    %23 = arith.subf %14, %2 : vector<16x128xf32>
    %24 = arith.mulf %22, %23 : vector<16x128xf32>
    %25 = arith.addf %2, %24 : vector<16x128xf32>
    %c0_13 = arith.constant 0 : index
    %c0_14 = arith.constant 0 : index
    %26 = vector.load %arg5[%c0_13, %c0_14] : memref<16x128xf32, #tpu.memory_space<vmem>>, vector<16x128xf32>
    tpu.vector_store %arg5[%c0_13, %c0_14], %25 {strides = array<i32>} : memref<16x128xf32, #tpu.memory_space<vmem>>, vector<16x128xf32>,
    %c1_i32 = arith.constant 1 : i32
    %c0_15 = arith.constant 0 : index
    %c0_16 = arith.constant 0 : index
    %27 = vector.load %arg5[%c0_15, %c0_16] : memref<16x128xf32, #tpu.memory_space<vmem>>, vector<16x128xf32>
    %28 = arith.index_cast %c1_i32 : i32 to index
    %c0_17 = arith.constant 0 : index
    %c0_18 = arith.constant 0 : index
    %29 = vector.load %arg2[%28, %c0_17, %c0_18] : memref<2x128x256xf32, #tpu.memory_space<vmem>>, vector<1x128x256xf32>
    %30 = vector.shape_cast %29 : vector<1x128x256xf32> to vector<128x256xf32>
    %31 = arith.index_cast %c1_i32 : i32 to index
    %c0_19 = arith.constant 0 : index
    %c0_20 = arith.constant 0 : index
    %32 = vector.load %arg3[%31, %c0_19, %c0_20] : memref<2x1x256xf32, #tpu.memory_space<vmem>>, vector<1x1x256xf32>
    %33 = vector.shape_cast %32 : vector<1x1x256xf32> to vector<1x256xf32>
    %cst_21 = arith.constant dense<0.000000e+00> : vector<16x256xf32>
    %34 = tpu.matmul %27, %30, %cst_21 {dimension_numbers = #tpu.dot_dimension_numbers<[1], [0], [0], [1], [0, 0, 1, 1], [], []>} : vector<16x128xf32>, vector<128x256xf32>, vector<16x256xf32> -> vector<16x256xf32>
    %35 = vector.broadcast %33 : vector<1x256xf32> to vector<16x256xf32>
    %36 = arith.addf %34, %35 : vector<16x256xf32>
    %37 = vector.extract_strided_slice %36 {offsets = [0, 0], sizes = [16, 128], strides = [1, 1]} : vector<16x256xf32> to vector<16x128xf32>
    %cst_22 = arith.constant 0.000000e+00 : f32
    %38 = vector.broadcast %cst_22 : f32 to vector<16x128xf32>
    %39 = arith.maximumf %37, %38 : vector<16x128xf32>
    %40 = vector.extract_strided_slice %36 {offsets = [0, 128], sizes = [16, 128], strides = [1, 1]} : vector<16x256xf32> to vector<16x128xf32>
    %cst_23 = arith.constant 5.000000e-01 : f32
    %41 = vector.broadcast %cst_23 : f32 to vector<16x128xf32>
    %42 = arith.mulf %41, %40 : vector<16x128xf32>
    %43 = math.tanh %42 : vector<16x128xf32>
    %cst_24 = arith.constant 1.000000e+00 : f32
    %44 = vector.broadcast %cst_24 : f32 to vector<16x128xf32>
    %45 = arith.addf %43, %44 : vector<16x128xf32>
    %cst_25 = arith.constant 5.000000e-01 : f32
    %46 = vector.broadcast %cst_25 : f32 to vector<16x128xf32>
    %47 = arith.mulf %46, %45 : vector<16x128xf32>
    %48 = arith.subf %39, %27 : vector<16x128xf32>
    %49 = arith.mulf %47, %48 : vector<16x128xf32>
    %50 = arith.addf %27, %49 : vector<16x128xf32>
    %c0_26 = arith.constant 0 : index
    %c0_27 = arith.constant 0 : index
    %51 = vector.load %arg5[%c0_26, %c0_27] : memref<16x128xf32, #tpu.memory_space<vmem>>, vector<16x128xf32>
    tpu.vector_store %arg5[%c0_26, %c0_27], %50 {strides = array<i32>} : memref<16x128xf32, #tpu.memory_space<vmem>>, vector<16x128xf32>,
    %c2_i32 = arith.constant 2 : i32
    %c0_28 = arith.constant 0 : index
    %c0_29 = arith.constant 0 : index
    %52 = vector.load %arg5[%c0_28, %c0_29] : memref<16x128xf32, #tpu.memory_space<vmem>>, vector<16x128xf32>
    %c0_30 = arith.constant 0 : index
    %c0_31 = arith.constant 0 : index
    %53 = vector.load %arg4[%c0_30, %c0_31] : memref<16x128xf32, #tpu.memory_space<vmem>>, vector<16x128xf32>
    tpu.vector_store %arg4[%c0_30, %c0_31], %52 {strides = array<i32>} : memref<16x128xf32, #tpu.memory_space<vmem>>, vector<16x128xf32>,
    return
  }
  func.func @transform_0(%arg0: i32) -> (i32, i32) {
    %c0_i32 = arith.constant 0 : i32
    %c0_i32_0 = arith.constant 0 : i32
    return %arg0, %c0_i32 : i32, i32
  }
  func.func @transform_1(%arg0: i32) -> (i32, i32, i32) {
    %c0_i32 = arith.constant 0 : i32
    %c0_i32_0 = arith.constant 0 : i32
    %c0_i32_1 = arith.constant 0 : i32
    %c0_i32_2 = arith.constant 0 : i32
    return %c0_i32, %c0_i32_0, %c0_i32_1 : i32, i32, i32
  }
  func.func @transform_2(%arg0: i32) -> (i32, i32, i32) {
    %c0_i32 = arith.constant 0 : i32
    %c0_i32_0 = arith.constant 0 : i32
    %c0_i32_1 = arith.constant 0 : i32
    %c0_i32_2 = arith.constant 0 : i32
    return %c0_i32, %c0_i32_0, %c0_i32_1 : i32, i32, i32
  }
  func.func @transform_3(%arg0: i32) -> (i32, i32) {
    %c0_i32 = arith.constant 0 : i32
    %c0_i32_0 = arith.constant 0 : i32
    return %arg0, %c0_i32 : i32, i32
  }
}

</mosaic_0001>

<llo_original>
// kernel: tpu_custom_call.1
$region0: #{tpu_custom_call.1}
  #allocation0 [shape = 'u32[]', space=smem, size = 0x4, offset = 0x4, fixed_abs, tag = 'smem constant byte address 0x4 - core index']
  #allocation1 [shape = 'u32[144,128]{1,0:T(1,128)}', space=vmem, size = 0x12000, scoped, tag = 'internal scratch']
  #allocation2 [shape = 'f32[16,128]{1,0:T(8,128)}', space=vmem, size = 0x2000, scoped, tag = 'scratch operand']
  %s0 = inlined_call_operand.hbm [shape: f32[16,128], index: 0, kind: input, shape index: {}]
  %s1 = inlined_call_operand.hbm [shape: f32[2,128,256], index: 1, kind: input, shape index: {}]
  %s2 = inlined_call_operand.vmem [shape: f32[2,1,256], index: 2, kind: input, shape index: {}]
  %s3 = inlined_call_operand.hbm [shape: f32[16,128], index: 3, kind: output, shape index: {}]
  %s4 = sld [smem:[#allocation0]]
  $region30: #{tpu_custom_call.1} parent=0
    _
  %s6 = ssub.s32 1, %s4
  %s7 = scalar_select 0, %s6, %s4
  $region1: #{tpu_custom_call.1} parent=0
    #allocation3 [shape = 'u8[8192]{0}', space=vmem, size = 0x2000, scoped, tag = 'input window, operand 0, single buffered']
    #allocation4 [shape = 's32[1]{0}', space=sflag, size = 0x4, scoped, tag = 'scoped memory for tpu_custom_call.1']
    #allocation5 [shape = 's32[1]{0}', space=sflag, size = 0x4, scoped, tag = 'scoped memory for tpu_custom_call.1']
    #allocation6 [shape = 'u8[262144]{0}', space=vmem, size = 0x40000, scoped, tag = 'input window, operand 1, single buffered']
    #allocation7 [shape = 's32[1]{0}', space=sflag, size = 0x4, scoped, tag = 'scoped memory for tpu_custom_call.1']
    #allocation8 [shape = 'u8[8192]{0}', space=vmem, size = 0x2000, scoped, tag = 'output window, operand 0, single buffered']
    %8 = vsyncpa [#allocation4], 0
    %9 = vsyncpa [#allocation7], 0
    %10 = vsyncpa [#allocation5], 0
    // Predicated region
    $region2: #{tpu_custom_call.1} parent=1 // pred_check
      _
    $region3: #{tpu_custom_call.1} parent=1 // pred_check_branch
      %12 = sbr.rel (0) target = $region5
    $region4: #{tpu_custom_call.1} parent=1 // pred_region
      %s14 = ssub.s32 256, 256
      %15 = vsyncadd [#allocation4], %s14
      %s16 = sshll.u32 [#allocation3], 4
      %s17 = int_to_ptr.vmem [resolvable:$true] %s16
      %22 = dma.hbm_to_vmem [thread:$0]  %s0, 256, %s17, [#allocation4], 128, 128, 8
    $region5: #{tpu_custom_call.1} parent=1 // pred_fallthru
      _
    // Predicated region
    $region6: #{tpu_custom_call.1} parent=1 // pred_check
      _
    $region7: #{tpu_custom_call.1} parent=1 // pred_check_branch
      %24 = sbr.rel (0) target = $region9
    $region8: #{tpu_custom_call.1} parent=1 // pred_region
      %s26 = ssub.s32 8192, 8192
      %27 = vsyncadd [#allocation7], %s26
      %s28 = sshll.u32 [#allocation6], 4
      %s29 = int_to_ptr.vmem [resolvable:$true] %s28
      %34 = dma.hbm_to_vmem [thread:$0]  %s1, 8192, %s29, [#allocation7], 256, 256, 16
    $region9: #{tpu_custom_call.1} parent=1 // pred_fallthru
      _
    // Predicated region
    $region10: #{tpu_custom_call.1} parent=1 // pred_check
      _
    $region11: #{tpu_custom_call.1} parent=1 // pred_check_branch
      %36 = sbr.rel (0) target = $region13
    $region12: #{tpu_custom_call.1} parent=1 // pred_region
      _
    $region13: #{tpu_custom_call.1} parent=1 // pred_fallthru
      _
    // Predicated region
    $region14: #{tpu_custom_call.1} parent=1 // pred_check
      _
    $region15: #{tpu_custom_call.1} parent=1 // pred_check_branch
      %38 = sbr.rel (0) target = $region17
    $region16: #{tpu_custom_call.1} parent=1 // pred_region
      %39 = dma.done [#allocation4], 256
    $region17: #{tpu_custom_call.1} parent=1 // pred_fallthru
      _
    // Predicated region
    $region18: #{tpu_custom_call.1} parent=1 // pred_check
      _
    $region19: #{tpu_custom_call.1} parent=1 // pred_check_branch
      %41 = sbr.rel (0) target = $region21
    $region20: #{tpu_custom_call.1} parent=1 // pred_region
      %42 = dma.done [#allocation7], 8192
    $region21: #{tpu_custom_call.1} parent=1 // pred_fallthru
      _
    %v43 = vld [vmem:[#allocation3] sm:$0xff]
    %v44 = vld [vmem:[#allocation3 + $0x8] sm:$0xff]
    %45 = vst [vmem:[#allocation2] sm:$0xff] %v43
    %46 = vst [vmem:[#allocation2 + $0x8] sm:$0xff] %v44
    %v47 = vld [vmem:[#allocation2] sm:$0xff]
    %v48 = vld [vmem:[#allocation2 + $0x8] sm:$0xff]
    %v49 = vld [vmem:[#allocation6] sm:$0xff]
    %v50 = vld [vmem:[#allocation6 + $0x8] sm:$0xff]
    %v51 = vld [vmem:[#allocation6 + $0x10] sm:$0xff]
    %v52 = vld [vmem:[#allocation6 + $0x18] sm:$0xff]
    %v53 = vld [vmem:[#allocation6 + $0x20] sm:$0xff]
    %v54 = vld [vmem:[#allocation6 + $0x28] sm:$0xff]
    %v55 = vld [vmem:[#allocation6 + $0x30] sm:$0xff]
    %v56 = vld [vmem:[#allocation6 + $0x38] sm:$0xff]
    %v57 = vld [vmem:[#allocation6 + $0x40] sm:$0xff]
    %v58 = vld [vmem:[#allocation6 + $0x48] sm:$0xff]
    %v59 = vld [vmem:[#allocation6 + $0x50] sm:$0xff]
    %v60 = vld [vmem:[#allocation6 + $0x58] sm:$0xff]
    %v61 = vld [vmem:[#allocation6 + $0x60] sm:$0xff]
    %v62 = vld [vmem:[#allocation6 + $0x68] sm:$0xff]
    %v63 = vld [vmem:[#allocation6 + $0x70] sm:$0xff]
    %v64 = vld [vmem:[#allocation6 + $0x78] sm:$0xff]
    %v65 = vld [vmem:[#allocation6 + $0x80] sm:$0xff]
    %v66 = vld [vmem:[#allocation6 + $0x88] sm:$0xff]
    %v67 = vld [vmem:[#allocation6 + $0x90] sm:$0xff]
    %v68 = vld [vmem:[#allocation6 + $0x98] sm:$0xff]
    %v69 = vld [vmem:[#allocation6 + $0xa0] sm:$0xff]
    %v70 = vld [vmem:[#allocation6 + $0xa8] sm:$0xff]
    %v71 = vld [vmem:[#allocation6 + $0xb0] sm:$0xff]
    %v72 = vld [vmem:[#allocation6 + $0xb8] sm:$0xff]
    %v73 = vld [vmem:[#allocation6 + $0xc0] sm:$0xff]
    %v74 = vld [vmem:[#allocation6 + $0xc8] sm:$0xff]
    %v75 = vld [vmem:[#allocation6 + $0xd0] sm:$0xff]
    %v76 = vld [vmem:[#allocation6 + $0xd8] sm:$0xff]
    %v77 = vld [vmem:[#allocation6 + $0xe0] sm:$0xff]
    %v78 = vld [vmem:[#allocation6 + $0xe8] sm:$0xff]
    %v79 = vld [vmem:[#allocation6 + $0xf0] sm:$0xff]
    %v80 = vld [vmem:[#allocation6 + $0xf8] sm:$0xff]
    %v81 = vld [vmem:[%s2] sm:$0x3]
    %v83 = vlaneseq
    %v84 = vshrl.u32 %v83, 7
    %v85 = vsub.s32 0, %v84
    %v86 = vrot.slane %v81, %v85
    %v87 = vlaneseq
    %v88 = vshrl.u32 %v87, 7
    %v89 = vsub.s32 1, %v88
    %v90 = vrot.slane %v81, %v89
    %93 = vmatprep.subr.mxu0 %v50
    %94 = vmatpush1.msra.mxu0 %v49
    %95 = vmatprep.subr.mxu0 %v52
    %96 = vmatpush1.msra.mxu0 %v51
    %97 = vmatprep.subr.mxu0 %v54
    %98 = vmatpush1.msra.mxu0 %v53
    %99 = vmatprep.subr.mxu0 %v56
    %100 = vmatpush1.msra.mxu0 %v55
    %101 = vmatprep.subr.mxu0 %v58
    %102 = vmatpush1.msra.mxu0 %v57
    %103 = vmatprep.subr.mxu0 %v60
    %104 = vmatpush1.msra.mxu0 %v59
    %105 = vmatprep.subr.mxu0 %v62
    %106 = vmatpush1.msra.mxu0 %v61
    %107 = vmatprep.subr.mxu0 %v64
    %108 = vmatpush1.msra.mxu0 %v63
    %109 = vmatprep.subr.mxu0 %v66
    %110 = vmatpush1.msra.mxu0 %v65
    %111 = vmatprep.subr.mxu0 %v68
    %112 = vmatpush1.msra.mxu0 %v67
    %113 = vmatprep.subr.mxu0 %v70
    %114 = vmatpush1.msra.mxu0 %v69
    %115 = vmatprep.subr.mxu0 %v72
    %116 = vmatpush1.msra.mxu0 %v71
    %117 = vmatprep.subr.mxu0 %v74
    %118 = vmatpush1.msra.mxu0 %v73
    %119 = vmatprep.subr.mxu0 %v76
    %120 = vmatpush1.msra.mxu0 %v75
    %121 = vmatprep.subr.mxu0 %v78
    %122 = vmatpush1.msra.mxu0 %v77
    %123 = vmatprep.subr.mxu0 %v80
    %124 = vmatpush1.msra.mxu0 %v79
    %125 = vmatprep.subr.mxu0 0.0
    %126 = vmatpush1.msra.mxu0 0.0
    %127 = vmatprep.subr.mxu0 0.0
    %128 = vmatpush1.msra.mxu0 0.0
    %129 = vmatprep.subr.mxu0 0.0
    %130 = vmatpush1.msra.mxu0 0.0
    %131 = vmatprep.subr.mxu0 0.0
    %132 = vmatpush1.msra.mxu0 0.0
    %133 = vmatprep.subr.mxu0 0.0
    %134 = vmatpush1.msra.mxu0 0.0
    %135 = vmatprep.subr.mxu0 0.0
    %136 = vmatpush1.msra.mxu0 0.0
    %137 = vmatprep.subr.mxu0 0.0
    %138 = vmatpush1.msra.mxu0 0.0
    %139 = vmatprep.subr.mxu0 0.0
    %140 = vmatpush1.msra.mxu0 0.0
    %141 = vmatprep.subr.mxu0 0.0
    %142 = vmatpush1.msra.mxu0 0.0
    %143 = vmatprep.subr.mxu0 0.0
    %144 = vmatpush1.msra.mxu0 0.0
    %145 = vmatprep.subr.mxu0 0.0
    %146 = vmatpush1.msra.mxu0 0.0
    %147 = vmatprep.subr.mxu0 0.0
    %148 = vmatpush1.msra.mxu0 0.0
    %149 = vmatprep.subr.mxu0 0.0
    %150 = vmatpush1.msra.mxu0 0.0
    %151 = vmatprep.subr.mxu0 0.0
    %152 = vmatpush1.msra.mxu0 0.0
    %153 = vmatprep.subr.mxu0 0.0
    %154 = vmatpush1.msra.mxu0 0.0
    %155 = vmatprep.subr.mxu0 0.0
    %156 = vmatpush1.msra.mxu0 0.0
    %157 = vmatprep.mubr.f32.mxu0 0.0
    %158 = vmatmul.mubr.f32.gmra.mrb[0].mxu0 %v47
    %v159 = vpop.f32.mrb[0].mxu0
    %v160 = vadd.f32 %v86, %v159
    %v161 = vpop.f32.mrb[0].mxu0
    %v162 = vadd.f32 %v90, %v161
    %163 = vmatprep.mubr.f32.mxu0 0.0
    %164 = vmatmul.mubr.f32.gmra.mrb[0].mxu0 %v48
    %v165 = vpop.f32.mrb[0].mxu0
    %v166 = vadd.f32 %v86, %v165
    %v167 = vpop.f32.mrb[0].mxu0
    %v168 = vadd.f32 %v90, %v167
    %169 = vdwg.mxu0
    %v170 = vmax.f32 %v160, 0.0
    %v171 = vmax.f32 %v166, 0.0
    %v172 = vmul.f32 %v162, 0.5
    %v173 = vmul.f32 %v168, 0.5
    %v174 = vtanh.pop %v172
    %v175 = vtanh.pop %v173
    %v176 = vadd.f32 %v174, 1.0
    %v177 = vadd.f32 %v175, 1.0
    %v178 = vmul.f32 %v176, 0.5
    %v179 = vmul.f32 %v177, 0.5
    %v180 = vsub.f32 %v170, %v47
    %v181 = vsub.f32 %v171, %v48
    %v182 = vmul.f32 %v178, %v180
    %v183 = vmul.f32 %v179, %v181
    %v184 = vadd.f32 %v47, %v182
    %v185 = vadd.f32 %v48, %v183
    %186 = vst [vmem:[#allocation2] sm:$0xff] %v184
    %187 = vst [vmem:[#allocation2 + $0x8] sm:$0xff] %v185
    %v188 = vld [vmem:[#allocation2] sm:$0xff]
    %v189 = vld [vmem:[#allocation2 + $0x8] sm:$0xff]
    %s190 = scalar_lea.vmem [#allocation6], 256
    %v191 = vld [vmem:[%s190] sm:$0xff]
    %v192 = vld [vmem:[%s190 + $0x8] sm:$0xff]
    %v193 = vld [vmem:[%s190 + $0x10] sm:$0xff]
    %v194 = vld [vmem:[%s190 + $0x18] sm:$0xff]
    %v195 = vld [vmem:[%s190 + $0x20] sm:$0xff]
    %v196 = vld [vmem:[%s190 + $0x28] sm:$0xff]
    %v197 = vld [vmem:[%s190 + $0x30] sm:$0xff]
    %v198 = vld [vmem:[%s190 + $0x38] sm:$0xff]
    %v199 = vld [vmem:[%s190 + $0x40] sm:$0xff]
    %v200 = vld [vmem:[%s190 + $0x48] sm:$0xff]
    %v201 = vld [vmem:[%s190 + $0x50] sm:$0xff]
    %v202 = vld [vmem:[%s190 + $0x58] sm:$0xff]
    %v203 = vld [vmem:[%s190 + $0x60] sm:$0xff]
    %v204 = vld [vmem:[%s190 + $0x68] sm:$0xff]
    %v205 = vld [vmem:[%s190 + $0x70] sm:$0xff]
    %v206 = vld [vmem:[%s190 + $0x78] sm:$0xff]
    %v207 = vld [vmem:[%s190 + $0x80] sm:$0xff]
    %v208 = vld [vmem:[%s190 + $0x88] sm:$0xff]
    %v209 = vld [vmem:[%s190 + $0x90] sm:$0xff]
    %v210 = vld [vmem:[%s190 + $0x98] sm:$0xff]
    %v211 = vld [vmem:[%s190 + $0xa0] sm:$0xff]
    %v212 = vld [vmem:[%s190 + $0xa8] sm:$0xff]
    %v213 = vld [vmem:[%s190 + $0xb0] sm:$0xff]
    %v214 = vld [vmem:[%s190 + $0xb8] sm:$0xff]
    %v215 = vld [vmem:[%s190 + $0xc0] sm:$0xff]
    %v216 = vld [vmem:[%s190 + $0xc8] sm:$0xff]
    %v217 = vld [vmem:[%s190 + $0xd0] sm:$0xff]
    %v218 = vld [vmem:[%s190 + $0xd8] sm:$0xff]
    %v219 = vld [vmem:[%s190 + $0xe0] sm:$0xff]
    %v220 = vld [vmem:[%s190 + $0xe8] sm:$0xff]
    %v221 = vld [vmem:[%s190 + $0xf0] sm:$0xff]
    %v222 = vld [vmem:[%s190 + $0xf8] sm:$0xff]
    %s223 = scalar_lea.vmem %s2, 2
    %v224 = vld [vmem:[%s223] sm:$0x3]
    %v226 = vlaneseq
    %v227 = vshrl.u32 %v226, 7
    %v228 = vsub.s32 0, %v227
    %v229 = vrot.slane %v224, %v228
    %v230 = vlaneseq
    %v231 = vshrl.u32 %v230, 7
    %v232 = vsub.s32 1, %v231
    %v233 = vrot.slane %v224, %v232
    %236 = vmatprep.subr.mxu0 %v192
    %237 = vmatpush1.msra.mxu0 %v191
    %238 = vmatprep.subr.mxu0 %v194
    %239 = vmatpush1.msra.mxu0 %v193
    %240 = vmatprep.subr.mxu0 %v196
    %241 = vmatpush1.msra.mxu0 %v195
    %242 = vmatprep.subr.mxu0 %v198
    %243 = vmatpush1.msra.mxu0 %v197
    %244 = vmatprep.subr.mxu0 %v200
    %245 = vmatpush1.msra.mxu0 %v199
    %246 = vmatprep.subr.mxu0 %v202
    %247 = vmatpush1.msra.mxu0 %v201
    %248 = vmatprep.subr.mxu0 %v204
    %249 = vmatpush1.msra.mxu0 %v203
    %250 = vmatprep.subr.mxu0 %v206
    %251 = vmatpush1.msra.mxu0 %v205
    %252 = vmatprep.subr.mxu0 %v208
    %253 = vmatpush1.msra.mxu0 %v207
    %254 = vmatprep.subr.mxu0 %v210
    %255 = vmatpush1.msra.mxu0 %v209
    %256 = vmatprep.subr.mxu0 %v212
    %257 = vmatpush1.msra.mxu0 %v211
    %258 = vmatprep.subr.mxu0 %v214
    %259 = vmatpush1.msra.mxu0 %v213
    %260 = vmatprep.subr.mxu0 %v216
    %261 = vmatpush1.msra.mxu0 %v215
    %262 = vmatprep.subr.mxu0 %v218
    %263 = vmatpush1.msra.mxu0 %v217
    %264 = vmatprep.subr.mxu0 %v220
    %265 = vmatpush1.msra.mxu0 %v219
    %266 = vmatprep.subr.mxu0 %v222
    %267 = vmatpush1.msra.mxu0 %v221
    %268 = vmatprep.subr.mxu0 0.0
    %269 = vmatpush1.msra.mxu0 0.0
    %270 = vmatprep.subr.mxu0 0.0
    %271 = vmatpush1.msra.mxu0 0.0
    %272 = vmatprep.subr.mxu0 0.0
    %273 = vmatpush1.msra.mxu0 0.0
    %274 = vmatprep.subr.mxu0 0.0
    %275 = vmatpush1.msra.mxu0 0.0
    %276 = vmatprep.subr.mxu0 0.0
    %277 = vmatpush1.msra.mxu0 0.0
    %278 = vmatprep.subr.mxu0 0.0
    %279 = vmatpush1.msra.mxu0 0.0
    %280 = vmatprep.subr.mxu0 0.0
    %281 = vmatpush1.msra.mxu0 0.0
    %282 = vmatprep.subr.mxu0 0.0
    %283 = vmatpush1.msra.mxu0 0.0
    %284 = vmatprep.subr.mxu0 0.0
    %285 = vmatpush1.msra.mxu0 0.0
    %286 = vmatprep.subr.mxu0 0.0
    %287 = vmatpush1.msra.mxu0 0.0
    %288 = vmatprep.subr.mxu0 0.0
    %289 = vmatpush1.msra.mxu0 0.0
    %290 = vmatprep.subr.mxu0 0.0
    %291 = vmatpush1.msra.mxu0 0.0
    %292 = vmatprep.subr.mxu0 0.0
    %293 = vmatpush1.msra.mxu0 0.0
    %294 = vmatprep.subr.mxu0 0.0
    %295 = vmatpush1.msra.mxu0 0.0
    %296 = vmatprep.subr.mxu0 0.0
    %297 = vmatpush1.msra.mxu0 0.0
    %298 = vmatprep.subr.mxu0 0.0
    %299 = vmatpush1.msra.mxu0 0.0
    %300 = vmatprep.mubr.f32.mxu0 0.0
    %301 = vmatmul.mubr.f32.gmra.mrb[0].mxu0 %v188
    %v302 = vpop.f32.mrb[0].mxu0
    %v303 = vadd.f32 %v229, %v302
    %v304 = vpop.f32.mrb[0].mxu0
    %v305 = vadd.f32 %v233, %v304
    %306 = vmatprep.mubr.f32.mxu0 0.0
    %307 = vmatmul.mubr.f32.gmra.mrb[0].mxu0 %v189
    %v308 = vpop.f32.mrb[0].mxu0
    %v309 = vadd.f32 %v229, %v308
    %v310 = vpop.f32.mrb[0].mxu0
    %v311 = vadd.f32 %v233, %v310
    %312 = vdwg.mxu0
    %v313 = vmax.f32 %v303, 0.0
    %v314 = vmax.f32 %v309, 0.0
    %v315 = vmul.f32 %v305, 0.5
    %v316 = vmul.f32 %v311, 0.5
    %v317 = vtanh.pop %v315
    %v318 = vtanh.pop %v316
    %v319 = vadd.f32 %v317, 1.0
    %v320 = vadd.f32 %v318, 1.0
    %v321 = vmul.f32 %v319, 0.5
    %v322 = vmul.f32 %v320, 0.5
    %v323 = vsub.f32 %v313, %v188
    %v324 = vsub.f32 %v314, %v189
    %v325 = vmul.f32 %v321, %v323
    %v326 = vmul.f32 %v322, %v324
    %v327 = vadd.f32 %v188, %v325
    %v328 = vadd.f32 %v189, %v326
    %329 = vst [vmem:[#allocation2] sm:$0xff] %v327
    %330 = vst [vmem:[#allocation2 + $0x8] sm:$0xff] %v328
    %v331 = vld [vmem:[#allocation2] sm:$0xff]
    %v332 = vld [vmem:[#allocation2 + $0x8] sm:$0xff]
    %333 = vst [vmem:[#allocation8] sm:$0xff] %v331
    %334 = vst [vmem:[#allocation8 + $0x8] sm:$0xff] %v332
    // Predicated region
    $region22: #{tpu_custom_call.1} parent=1 // pred_check
      _
    $region23: #{tpu_custom_call.1} parent=1 // pred_check_branch
      %336 = sbr.rel (0) target = $region25
    $region24: #{tpu_custom_call.1} parent=1 // pred_region
      %s338 = ssub.s32 256, 256
      %339 = vsyncadd [#allocation5], %s338
      %s340 = sshll.u32 [#allocation8], 4
      %s341 = int_to_ptr.vmem [resolvable:$true] %s340
      %346 = dma.vmem_to_hbm [thread:$0]  %s341, 256, %s3, [#allocation5], 128, 128, 8
    $region25: #{tpu_custom_call.1} parent=1 // pred_fallthru
      _
    // Predicated region
    $region26: #{tpu_custom_call.1} parent=1 // pred_check
      _
    $region27: #{tpu_custom_call.1} parent=1 // pred_check_branch
      %348 = sbr.rel (0) target = $region29
    $region28: #{tpu_custom_call.1} parent=1 // pred_region
      %349 = dma.done [#allocation5], 256
    $region29: #{tpu_custom_call.1} parent=1 // pred_fallthru
      _
    %350 = vsyncpa [#allocation4], 1
    %351 = vsyncpa [#allocation7], 1
    %352 = vsyncpa [#allocation5], 1

</llo_original>
